<compile_context>
chip_gen: v7x
topology: tpu7x:2x2x1
jax: 0.10.0
libtpu: 0.0.40
codegen_flags: <defaults>
</compile_context>

<pallas_src>
import functools

import jax
import jax.numpy as jnp
from jax import lax
from jax.experimental import pallas as pl
from jax.experimental.pallas import tpu as pltpu


def _detect_vmem_limit():
    """Generation-aware scoped-VMEM budget: ~3/4 of physical, clamped to [32, 96] MiB."""
    cap = 64 * 1024 * 1024
    try:
        info = pltpu.get_tpu_info()
        cap = int(getattr(info, "vmem_capacity_bytes", cap) or cap)
    except Exception:
        pass
    return max(32 * 1024 * 1024, min((cap * 3) // 4, 96 * 1024 * 1024))


VMEM_LIMIT = _detect_vmem_limit()


def _pick_tile(dim, target, align):
    """Largest multiple of `align` that is <= target and divides dim; else full dim."""
    if dim <= target:
        return dim
    t = (target // align) * align
    while t >= align:
        if dim % t == 0:
            return t
        t -= align
    return dim


# ----------------------------- Pallas kernels -------------------------------

def _fused_linear_kernel(x_ref, w_ref, b_ref, o_ref, *, activation):
    # bf16 x bf16 MXU matmul, f32 accumulation; epilogue math stays in f32
    # (v5e has no bf16 VPU/EUP).
    y = jnp.dot(x_ref[...], w_ref[...], preferred_element_type=jnp.float32)
    y = y + b_ref[...]
    if activation == "relu":
        y = jnp.maximum(y, 0.0)
    elif activation == "tanh":
        y = jnp.tanh(y)
    elif activation == "gelu":
        # tanh-approximation GELU (BERT intermediate activation)
        y = 0.5 * y * (1.0 + jnp.tanh(0.7978845608028654 * (y + 0.044715 * y * y * y)))
    o_ref[...] = y.astype(o_ref.dtype)


def fused_linear(x, w, b, activation="none", out_dtype=jnp.bfloat16,
                 tm_target=1024, tn_target=512):
    """y = act(x @ w + b); x:(M,K) w:(K,N) b:(N,). bf16 MXU operands, f32 epilogue.

    Large tm keeps the number of full-weight re-reads (M/tm) small; the x tile stays
    resident across the inner j axis.
    """
    M, K = x.shape
    K2, N = w.shape
    assert K == K2
    tm = _pick_tile(M, tm_target, 16)   # 16: bf16 sublane packing
    tn = _pick_tile(N, tn_target, 128)
    b2 = b.astype(jnp.float32).reshape(1, N)
    return pl.pallas_call(
        functools.partial(_fused_linear_kernel, activation=activation),
        out_shape=jax.ShapeDtypeStruct((M, N), out_dtype),
        grid=(M // tm, N // tn),
        in_specs=[
            pl.BlockSpec((tm, K), lambda i, j: (i, 0)),
            pl.BlockSpec((K, tn), lambda i, j: (0, j)),
            pl.BlockSpec((1, tn), lambda i, j: (0, j)),
        ],
        out_specs=pl.BlockSpec((tm, tn), lambda i, j: (i, j)),
        compiler_params=pltpu.CompilerParams(
            dimension_semantics=("parallel", "parallel"),
            vmem_limit_bytes=VMEM_LIMIT),
    )(x.astype(jnp.bfloat16), w.astype(jnp.bfloat16), b2)


def _linear_residual_ln_kernel(x_ref, w_ref, b_ref, res_ref, g_ref, bt_ref, o_ref, *, eps):
    # y = LayerNorm(residual + x @ w + b); matmul in bf16, everything else in f32.
    y = jnp.dot(x_ref[...], w_ref[...], preferred_element_type=jnp.float32)
    y = y + b_ref[...] + res_ref[...].astype(jnp.float32)
    mu = jnp.mean(y, axis=-1, keepdims=True)
    var = jnp.mean(jnp.square(y - mu), axis=-1, keepdims=True)
    y = (y - mu) * jax.lax.rsqrt(var + eps)          # rsqrt -> EUP slot
    y = y * g_ref[...] + bt_ref[...]
    o_ref[...] = y.astype(o_ref.dtype)


def linear_residual_ln(x, w, b, residual, gamma, beta, eps=1e-12,
                       out_dtype=jnp.bfloat16, tm_target=512):
    """LayerNorm(residual + x @ w + b); needs full N per block so LN sees the whole row."""
    M, K = x.shape
    K2, N = w.shape
    assert K == K2 and residual.shape == (M, N)
    tm = _pick_tile(M, tm_target, 16)
    b2 = b.astype(jnp.float32).reshape(1, N)
    g2 = gamma.astype(jnp.float32).reshape(1, N)
    bt2 = beta.astype(jnp.float32).reshape(1, N)
    return pl.pallas_call(
        functools.partial(_linear_residual_ln_kernel, eps=eps),
        out_shape=jax.ShapeDtypeStruct((M, N), out_dtype),
        grid=(M // tm,),
        in_specs=[
            pl.BlockSpec((tm, K), lambda i: (i, 0)),
            pl.BlockSpec((K, N), lambda i: (0, 0)),
            pl.BlockSpec((1, N), lambda i: (0, 0)),
            pl.BlockSpec((tm, N), lambda i: (i, 0)),
            pl.BlockSpec((1, N), lambda i: (0, 0)),
            pl.BlockSpec((1, N), lambda i: (0, 0)),
        ],
        out_specs=pl.BlockSpec((tm, N), lambda i: (i, 0)),
        compiler_params=pltpu.CompilerParams(
            dimension_semantics=("parallel",),
            vmem_limit_bytes=VMEM_LIMIT),
    )(x.astype(jnp.bfloat16), w.astype(jnp.bfloat16), b2,
      residual.astype(jnp.bfloat16), g2, bt2)


def _attention_kernel(qkv_ref, m_ref, o_ref, *, nh, dh, scale):
    """One batch element per grid step.

    Reads the fused (1, S, 3H) QKV slab directly (no JAX-side head-split transpose),
    loops heads so only one (S, S) f32 score tile is live at a time, and stores the
    context in merged (S, H) layout so no JAX-side merge transpose is needed either.
    """
    H = nh * dh
    mask = m_ref[0]                                       # (1, S) additive f32 mask
    for h in range(nh):
        # 1/sqrt(dh) folded into q (exact power-of-two for dh=64).
        q = qkv_ref[0, :, h * dh:(h + 1) * dh] * scale                   # (S, dh) bf16
        k = qkv_ref[0, :, H + h * dh:H + (h + 1) * dh]                   # (S, dh) bf16
        v = qkv_ref[0, :, 2 * H + h * dh:2 * H + (h + 1) * dh]           # (S, dh) bf16
        s = lax.dot_general(q, k, (((1,), (1,)), ((), ())),
                            preferred_element_type=jnp.float32)          # (S, S) f32
        s = s + mask
        s = s - jnp.max(s, axis=-1, keepdims=True)
        p = jnp.exp(s)
        p = p * pl.reciprocal(jnp.sum(p, axis=-1, keepdims=True), approx=True)
        ctx = jnp.dot(p.astype(v.dtype), v,
                      preferred_element_type=jnp.float32)                # (S, dh) f32
        o_ref[0, :, h * dh:(h + 1) * dh] = ctx.astype(o_ref.dtype)


def attention_core(qkv, mask_add, nh, dh):
    """qkv: (B, S, 3H) bf16 fused QKV; mask_add: (B, 1, S) f32 -> ctx (B, S, H) bf16."""
    B, S, H3 = qkv.shape
    H = nh * dh
    assert H3 == 3 * H
    scale = 1.0 / float(dh) ** 0.5
    return pl.pallas_call(
        functools.partial(_attention_kernel, nh=nh, dh=dh, scale=scale),
        out_shape=jax.ShapeDtypeStruct((B, S, H), jnp.bfloat16),
        grid=(B,),
        in_specs=[
            pl.BlockSpec((1, S, 3 * H), lambda b: (b, 0, 0)),
            pl.BlockSpec((1, 1, S), lambda b: (b, 0, 0)),   # no per-head mask replication
        ],
        out_specs=pl.BlockSpec((1, S, H), lambda b: (b, 0, 0)),
        compiler_params=pltpu.CompilerParams(
            dimension_semantics=("parallel",),
            vmem_limit_bytes=VMEM_LIMIT),
    )(qkv, mask_add)


def _pooler_head_kernel(x_ref, wp_ref, bp_ref, wc_ref, bc_ref, o_ref):
    # pooled = tanh(cls @ Wp + bp); logits = relu(pooled @ Wc + bc); f32 epilogue.
    pooled = jnp.dot(x_ref[...], wp_ref[...], preferred_element_type=jnp.float32)
    pooled = jnp.tanh(pooled + bp_ref[...])
    logits = jnp.dot(pooled.astype(wc_ref.dtype), wc_ref[...],
                     preferred_element_type=jnp.float32)
    logits = jnp.maximum(logits + bc_ref[...], 0.0)
    o_ref[...] = logits


def pooler_classifier(cls_tok, pool_w, pool_b, cls_w_pad, cls_b_pad, n_labels):
    """Fused BERT pooler + classifier head; classifier padded to lane-dense N."""
    B, H = cls_tok.shape
    N_pad = cls_w_pad.shape[1]
    out = pl.pallas_call(
        _pooler_head_kernel,
        out_shape=jax.ShapeDtypeStruct((B, N_pad), jnp.float32),
        grid=(1,),
        in_specs=[
            pl.BlockSpec((B, H), lambda i: (0, 0)),
            pl.BlockSpec((H, H), lambda i: (0, 0)),
            pl.BlockSpec((1, H), lambda i: (0, 0)),
            pl.BlockSpec((H, N_pad), lambda i: (0, 0)),
            pl.BlockSpec((1, N_pad), lambda i: (0, 0)),
        ],
        out_specs=pl.BlockSpec((B, N_pad), lambda i: (0, 0)),
        compiler_params=pltpu.CompilerParams(vmem_limit_bytes=VMEM_LIMIT),
    )(cls_tok.astype(jnp.bfloat16), pool_w.astype(jnp.bfloat16),
      pool_b.astype(jnp.float32).reshape(1, H), cls_w_pad,
      cls_b_pad.reshape(1, N_pad))
    return out[:, :n_labels]


# ----------------------------- plain-JAX glue --------------------------------

def layer_norm_f32(x, gamma, beta, eps=1e-12):
    mu = jnp.mean(x, axis=-1, keepdims=True)
    var = jnp.mean((x - mu) ** 2, axis=-1, keepdims=True)
    return (x - mu) / jnp.sqrt(var + eps) * gamma + beta


def init_params(key, *, vocab=64, max_pos=32, hidden=768, n_layers=2,
                n_heads=12, inter=1536, n_labels=15):
    std = 0.02
    keys = iter(jax.random.split(key, 16 + 8 * n_layers))

    def nrm(shape, dtype=jnp.bfloat16):
        return (std * jax.random.normal(next(keys), shape, dtype=jnp.float32)).astype(dtype)

    n_pad = max(128, ((n_labels + 127) // 128) * 128)
    cls_w = nrm((hidden, n_labels), jnp.float32)
    cls_w_pad = jnp.zeros((hidden, n_pad), jnp.bfloat16).at[:, :n_labels].set(
        cls_w.astype(jnp.bfloat16))
    cls_b_pad = jnp.zeros((n_pad,), jnp.float32)

    params = {
        "hidden": hidden, "heads": n_heads, "n_labels": n_labels,
        "word_emb": nrm((vocab, hidden), jnp.float32),
        "pos_emb": nrm((max_pos, hidden), jnp.float32),
        "type_emb": nrm((2, hidden), jnp.float32),
        "emb_ln_g": jnp.ones((hidden,), jnp.float32),
        "emb_ln_b": jnp.zeros((hidden,), jnp.float32),
        "pool_w": nrm((hidden, hidden)),
        "pool_b": jnp.zeros((hidden,), jnp.float32),
        "cls_w_pad": cls_w_pad,
        "cls_b_pad": cls_b_pad,
        "layers": [],
    }
    for _ in range(n_layers):
        wq, wk, wv = nrm((hidden, hidden)), nrm((hidden, hidden)), nrm((hidden, hidden))
        lp = {
            "w_qkv": jnp.concatenate([wq, wk, wv], axis=1),          # (H, 3H) bf16
            "b_qkv": jnp.zeros((3 * hidden,), jnp.float32),
            "wo": nrm((hidden, hidden)), "bo": jnp.zeros((hidden,), jnp.float32),
            "ln1_g": jnp.ones((hidden,), jnp.float32),
            "ln1_b": jnp.zeros((hidden,), jnp.float32),
            "w1": nrm((hidden, inter)), "b1": jnp.zeros((inter,), jnp.float32),
            "w2": nrm((inter, hidden)), "b2": jnp.zeros((hidden,), jnp.float32),
            "ln2_g": jnp.ones((hidden,), jnp.float32),
            "ln2_b": jnp.zeros((hidden,), jnp.float32),
        }
        params["layers"].append(lp)
    return params


def bert_classifier_forward(params, input_ids, mask):
    """Mirrors BertClassifier.forward: pooled = bert(ids, mask); relu(linear(pooled))."""
    B, S = input_ids.shape
    H = params["hidden"]
    nh = params["heads"]
    dh = H // nh

    # --- embeddings (f32) + embedding LayerNorm (plain JAX, one-off, tiny) ---
    emb = (params["word_emb"][input_ids]
           + params["pos_emb"][:S][None, :, :]
           + params["type_emb"][0][None, None, :])
    h = layer_norm_f32(emb, params["emb_ln_g"], params["emb_ln_b"]).astype(jnp.bfloat16)

    # additive attention mask, (B, 1, S) f32 — no per-head replication
    mask_add = ((1.0 - mask.astype(jnp.float32)) * -1e9)[:, None, :]

    # --- transformer encoder layers ---
    for lp in params["layers"]:
        x2 = h.reshape(B * S, H)

        # fused QKV projection: one kernel, x read once
        qkv = fused_linear(x2, lp["w_qkv"], lp["b_qkv"])               # (B*S, 3H) bf16
        # attention consumes the fused QKV slab directly and emits merged-head layout:
        # no JAX-side head split/merge transposes (leading-dim reshapes only).
        ctx = attention_core(qkv.reshape(B, S, 3 * H), mask_add, nh, dh)   # (B, S, H)
        ctx2 = ctx.reshape(B * S, H)

        # attention output projection + residual + LayerNorm fused in one kernel
        h = linear_residual_ln(ctx2, lp["wo"], lp["bo"], x2,
                               lp["ln1_g"], lp["ln1_b"]).reshape(B, S, H)

        # FFN: GELU projection, then output projection + residual + LayerNorm fused
        x2 = h.reshape(B * S, H)
        ff = fused_linear(x2, lp["w1"], lp["b1"], activation="gelu")   # (B*S, inter) bf16
        h = linear_residual_ln(ff, lp["w2"], lp["b2"], x2,
                               lp["ln2_g"], lp["ln2_b"]).reshape(B, S, H)

    # --- BERT pooler + module head fused: relu(Linear(tanh(Wp @ h[CLS]))) ---
    cls_tok = h[:, 0, :]                                               # (B, H)
    logits = pooler_classifier(cls_tok, params["pool_w"], params["pool_b"],
                               params["cls_w_pad"], params["cls_b_pad"],
                               params["n_labels"])
    return logits                                                      # (B, 15) f32


if __name__ == "__main__":
    key = jax.random.PRNGKey(0)
    kp, kid, kmask = jax.random.split(key, 3)

    B, S, VOCAB = 2, 8, 64
    params = init_params(kp, vocab=VOCAB, max_pos=32, hidden=768,
                         n_layers=2, n_heads=12, inter=1536, n_labels=15)

    input_ids = jax.random.randint(kid, (B, S), 0, VOCAB, dtype=jnp.int32)
    # attention mask: first batch fully attended, second batch has last 3 tokens padded
    mask = jnp.array([[1, 1, 1, 1, 1, 1, 1, 1],
                      [1, 1, 1, 1, 1, 0, 0, 0]], dtype=jnp.int32)

    out = bert_classifier_forward(params, input_ids, mask)
    out = jax.block_until_ready(out)
    assert out.shape == (B, 15)
    assert bool(jnp.all(out >= 0.0))          # ReLU output is non-negative
    assert bool(jnp.all(jnp.isfinite(out)))
    print("KERNEL_OK")
</pallas_src>

<mosaic_0001>
module attributes {stable_mosaic.version = 11 : i64} {
  func.func @_fused_linear_kernel(%arg0: i32, %arg1: i32, %arg2: memref<16x768xbf16, #tpu.memory_space<vmem>>, %arg3: memref<768x384xbf16, #tpu.memory_space<vmem>>, %arg4: memref<1x384xf32, #tpu.memory_space<vmem>>, %arg5: memref<16x384xbf16, #tpu.memory_space<vmem>>) attributes {dimension_semantics = [#tpu.dimension_semantics<parallel>, #tpu.dimension_semantics<parallel>], iteration_bounds = array<i64: 1, 6>, scalar_prefetch = 0 : i64, scratch_operands = 0 : i64, tpu.core_type = #tpu.core_type<tc>, window_params = [{transform_indices = @transform_0, window_bounds = array<i64: 16, 768>}, {transform_indices = @transform_1, window_bounds = array<i64: 768, 384>}, {transform_indices = @transform_2, window_bounds = array<i64: 1, 384>}, {transform_indices = @transform_3, window_bounds = array<i64: 16, 384>}]} {
    %c0 = arith.constant 0 : index
    %c0_0 = arith.constant 0 : index
    %0 = vector.load %arg2[%c0, %c0_0] : memref<16x768xbf16, #tpu.memory_space<vmem>>, vector<16x768xbf16>
    %c0_1 = arith.constant 0 : index
    %c0_2 = arith.constant 0 : index
    %1 = vector.load %arg3[%c0_1, %c0_2] : memref<768x384xbf16, #tpu.memory_space<vmem>>, vector<768x384xbf16>
    %cst = arith.constant dense<0.000000e+00> : vector<16x384xf32>
    %2 = tpu.matmul %0, %1, %cst {dimension_numbers = #tpu.dot_dimension_numbers<[1], [0], [0], [1], [0, 0, 1, 1], [], []>} : vector<16x768xbf16>, vector<768x384xbf16>, vector<16x384xf32> -> vector<16x384xf32>
    %c0_3 = arith.constant 0 : index
    %c0_4 = arith.constant 0 : index
    %3 = vector.load %arg4[%c0_3, %c0_4] : memref<1x384xf32, #tpu.memory_space<vmem>>, vector<1x384xf32>
    %4 = vector.broadcast %3 : vector<1x384xf32> to vector<16x384xf32>
    %5 = arith.addf %2, %4 : vector<16x384xf32>
    %6 = arith.truncf %5 : vector<16x384xf32> to vector<16x384xbf16>
    %c0_5 = arith.constant 0 : index
    %c0_6 = arith.constant 0 : index
    %7 = vector.load %arg5[%c0_5, %c0_6] : memref<16x384xbf16, #tpu.memory_space<vmem>>, vector<16x384xbf16>
    tpu.vector_store %arg5[%c0_5, %c0_6], %6 {strides = array<i32>} : memref<16x384xbf16, #tpu.memory_space<vmem>>, vector<16x384xbf16>,
    return
  }
  func.func @transform_0(%arg0: i32, %arg1: i32) -> (i32, i32) {
    %c0_i32 = arith.constant 0 : i32
    %c0_i32_0 = arith.constant 0 : i32
    return %arg0, %c0_i32 : i32, i32
  }
  func.func @transform_1(%arg0: i32, %arg1: i32) -> (i32, i32) {
    %c0_i32 = arith.constant 0 : i32
    %c0_i32_0 = arith.constant 0 : i32
    return %c0_i32, %arg1 : i32, i32
  }
  func.func @transform_2(%arg0: i32, %arg1: i32) -> (i32, i32) {
    %c0_i32 = arith.constant 0 : i32
    %c0_i32_0 = arith.constant 0 : i32
    return %c0_i32, %arg1 : i32, i32
  }
  func.func @transform_3(%arg0: i32, %arg1: i32) -> (i32, i32) {
    %c0_i32 = arith.constant 0 : i32
    return %arg0, %arg1 : i32, i32
  }
}

</mosaic_0001>

<llo_original>
// kernel: tpu_custom_call.1
$region0: #{tpu_custom_call.1}
  #allocation0 [shape = 'u32[]', space=smem, size = 0x4, offset = 0x4, fixed_abs, tag = 'smem constant byte address 0x4 - core index']
  #allocation1 [shape = 'u32[144,128]{1,0:T(1,128)}', space=vmem, size = 0x12000, scoped, tag = 'internal scratch']
  %s0 = inlined_call_operand.hbm [shape: bf16[16,768], index: 0, kind: input, shape index: {}]
  %s1 = inlined_call_operand.hbm [shape: bf16[768,2304], index: 1, kind: input, shape index: {}]
  %s2 = inlined_call_operand.hbm [shape: f32[1,2304], index: 2, kind: input, shape index: {}]
  %s3 = inlined_call_operand.hbm [shape: bf16[16,2304], index: 3, kind: output, shape index: {}]
  %s4 = sld [smem:[#allocation0]]
  $region57: #{tpu_custom_call.1} parent=0
    _
  %s6 = ssub.s32 1, %s4
  %s7 = scalar_select 0, %s6, %s4
  $region1: #{tpu_custom_call.1} parent=0
    #allocation2 [shape = 'u8[24576]{0}', space=vmem, size = 0x6000, scoped, tag = 'input window, operand 0, single buffered']
    #allocation3 [shape = 's32[2]{0}', space=sflag, size = 0x8, scoped, tag = 'scoped memory for tpu_custom_call.1']
    #allocation4 [shape = 's32[2]{0}', space=sflag, size = 0x8, scoped, tag = 'scoped memory for tpu_custom_call.1']
    #allocation5 [shape = 'u8[1179648]{0}', space=vmem, size = 0x120000, scoped, tag = 'input window, operand 1']
    #allocation6 [shape = 's32[2]{0}', space=sflag, size = 0x8, scoped, tag = 'scoped memory for tpu_custom_call.1']
    #allocation7 [shape = 'u8[3072]{0}', space=vmem, size = 0xc00, scoped, tag = 'input window, operand 2']
    #allocation8 [shape = 'u8[24576]{0}', space=vmem, size = 0x6000, scoped, tag = 'output window, operand 0']
    %8 = vsyncpa [#allocation3], 0
    %9 = vsyncpa [#allocation6], 0
    %s10 = scalar_lea.sflag [#allocation6], 1
    %11 = vsyncpa %s10, 0
    %12 = vsyncpa [#allocation4], 0
    %s13 = scalar_lea.sflag [#allocation4], 1
    %14 = vsyncpa %s13, 0
    loop: start=0, step=1, limit=8
    $region2: #{tpu_custom_call.1} parent=1 // loop_pre_header
      _
    $region3: #{tpu_custom_call.1} parent=1 // loop_header
      %s16 = sphi 0, %s20
      %p17 = scmp.ge.s32.totalorder %s16, 8
      %s23 = sphi 0, %s35
      %s24 = sphi 0, %s31
      %s25 = sphi 0, %s23
      %s26 = sphi 0, %s24
      %s27 = sphi 0, %s25
      %s28 = sphi 0, %s26
      %s38 = sphi 0, %s40
      %s41 = sphi 0, %s38
      %s42 = sphi 0, %s41
      %s58 = sphi 0, %s42
      %s64 = sphi 0, %s66
      %s67 = sphi 0, %s64
      %s68 = sphi 0, %s67
      %s84 = sphi 0, %s68
      %s90 = sphi 0, %s92
      %s93 = sphi 0, %s90
      %s94 = sphi 0, %s93
      %s110 = sphi 0, %s94
      %s118 = sphi 0, %s120
      %s121 = sphi 0, %s118
      %s122 = sphi 0, %s121
      %s138 = sphi 0, %s122
    $region4: #{tpu_custom_call.1} parent=1 // loop_header_branch
      %19 = sbr.rel (%p17) target = $region8
    $region5: #{tpu_custom_call.1} parent=1 // loop_body
      %s21 = ssub.s32 %s16, 1
      %s22 = ssub.s32 %s16, 2
      %s29 = sadd.s32 1, %s24
      %p30 = scmp.ge.s32.totalorder %s29, 6
      %s31 = scalar_select %p30, 0, %s29
      %s32 = sadd.s32 1, %s23
      %s33 = scalar_select %p30, %s32, %s23
      %p34 = scmp.ge.s32.totalorder %s33, 1
      %s35 = scalar_select %p34, 0, %s33
      %s36 = ssub.s32 %s23, %s35
      %p37 = scmp.eq.s32.totalorder %s36, 0
      %s39 = sadd.s32 %s38, 1
      %s40 = scalar_select %p37, %s38, %s39
      %p43 = pneg %p37
      %p44 = scmp.eq.s32.totalorder %s16, 5
      %p45 = por %p43, %p44
      %p46 = scmp.ne.s32.totalorder %s38, %s41
      %p47 = scmp.eq.s32.totalorder %s16, 0
      %p48 = por %p46, %p47
      %p49 = scmp.ne.s32.totalorder %s38, %s41
      %p50 = scmp.eq.s32.totalorder %s21, 5
      %p51 = por %p49, %p50
      %p52 = scmp.ne.s32.totalorder %s41, %s42
      %p53 = scmp.eq.s32.totalorder %s21, 0
      %p54 = por %p52, %p53
      %p55 = scmp.ne.s32.totalorder %s41, %s42
      %p56 = scmp.eq.s32.totalorder %s22, 5
      %p57 = por %p55, %p56
      %p59 = scmp.ne.s32.totalorder %s42, %s58
      %p60 = scmp.eq.s32.totalorder %s22, 0
      %p61 = por %p59, %p60
      %s62 = ssub.s32 %s24, %s31
      %p63 = scmp.eq.s32.totalorder %s62, 0
      %s65 = sadd.s32 %s64, 1
      %s66 = scalar_select %p63, %s64, %s65
      %p69 = pneg %p63
      %p70 = scmp.eq.s32.totalorder %s16, 5
      %p71 = por %p69, %p70
      %p72 = scmp.ne.s32.totalorder %s64, %s67
      %p73 = scmp.eq.s32.totalorder %s16, 0
      %p74 = por %p72, %p73
      %p75 = scmp.ne.s32.totalorder %s64, %s67
      %p76 = scmp.eq.s32.totalorder %s21, 5
      %p77 = por %p75, %p76
      %p78 = scmp.ne.s32.totalorder %s67, %s68
      %p79 = scmp.eq.s32.totalorder %s21, 0
      %p80 = por %p78, %p79
      %p81 = scmp.ne.s32.totalorder %s67, %s68
      %p82 = scmp.eq.s32.totalorder %s22, 5
      %p83 = por %p81, %p82
      %p85 = scmp.ne.s32.totalorder %s68, %s84
      %p86 = scmp.eq.s32.totalorder %s22, 0
      %p87 = por %p85, %p86
      %s88 = ssub.s32 %s24, %s31
      %p89 = scmp.eq.s32.totalorder %s88, 0
      %s91 = sadd.s32 %s90, 1
      %s92 = scalar_select %p89, %s90, %s91
      %p95 = pneg %p89
      %p96 = scmp.eq.s32.totalorder %s16, 5
      %p97 = por %p95, %p96
      %p98 = scmp.ne.s32.totalorder %s90, %s93
      %p99 = scmp.eq.s32.totalorder %s16, 0
      %p100 = por %p98, %p99
      %p101 = scmp.ne.s32.totalorder %s90, %s93
      %p102 = scmp.eq.s32.totalorder %s21, 5
      %p103 = por %p101, %p102
      %p104 = scmp.ne.s32.totalorder %s93, %s94
      %p105 = scmp.eq.s32.totalorder %s21, 0
      %p106 = por %p104, %p105
      %p107 = scmp.ne.s32.totalorder %s93, %s94
      %p108 = scmp.eq.s32.totalorder %s22, 5
      %p109 = por %p107, %p108
      %p111 = scmp.ne.s32.totalorder %s94, %s110
      %p112 = scmp.eq.s32.totalorder %s22, 0
      %p113 = por %p111, %p112
      %s114 = ssub.s32 %s23, %s35
      %s115 = ssub.s32 %s24, %s31
      %s116 = sor.u32 %s114, %s115
      %p117 = scmp.eq.s32.totalorder %s116, 0
      %s119 = sadd.s32 %s118, 1
      %s120 = scalar_select %p117, %s118, %s119
      %p123 = pneg %p117
      %p124 = scmp.eq.s32.totalorder %s16, 5
      %p125 = por %p123, %p124
      %p126 = scmp.ne.s32.totalorder %s118, %s121
      %p127 = scmp.eq.s32.totalorder %s16, 0
      %p128 = por %p126, %p127
      %p129 = scmp.ne.s32.totalorder %s118, %s121
      %p130 = scmp.eq.s32.totalorder %s21, 5
      %p131 = por %p129, %p130
      %p132 = scmp.ne.s32.totalorder %s121, %s122
      %p133 = scmp.eq.s32.totalorder %s21, 0
      %p134 = por %p132, %p133
      %p135 = scmp.ne.s32.totalorder %s121, %s122
      %p136 = scmp.eq.s32.totalorder %s22, 5
      %p137 = por %p135, %p136
      %p139 = scmp.ne.s32.totalorder %s122, %s138
      %p140 = scmp.eq.s32.totalorder %s22, 0
      %p141 = por %p139, %p140
      %p142 = scmp.le.s32.totalorder 1, %s16
      %p143 = scmp.lt.s32.totalorder %s16, 7
      %p144 = pnand %p142, %p143
      %p145 = pneg %p144
      // Predicated region
      $region9: #{tpu_custom_call.1} parent=5 // pred_check
        _
      $region10: #{tpu_custom_call.1} parent=5 // pred_check_branch
        %147 = sbr.rel (%p144) target = $region12
      $region11: #{tpu_custom_call.1} parent=5 // pred_region
        %s148 = ssub.s32 %s16, 1
        // Predicated region
        $region13: #{tpu_custom_call.1} parent=11 // pred_check
          %p149 = pneg %p54
        $region14: #{tpu_custom_call.1} parent=11 // pred_check_branch
          %151 = sbr.rel (%p149) target = $region16
        $region15: #{tpu_custom_call.1} parent=11 // pred_region
          %s152 = smul.u32 2, %s25
          %s154 = ssub.s32 768, 768
          %155 = vsyncadd [#allocation3], %s154
          %s156 = smul.addr %s152, 6
          %s157 = smul.addr %s156, 64
          %s158 = scalar_lea.hbm %s0, %s157
          %s159 = sshll.u32 [#allocation2], 4
          %s160 = int_to_ptr.vmem [resolvable:$true] %s159
          %165 = dma.hbm_to_vmem [thread:$0]  %s158, 768, %s160, [#allocation3], 384, 384, 24
        $region16: #{tpu_custom_call.1} parent=11 // pred_fallthru
          _
      $region12: #{tpu_custom_call.1} parent=5 // pred_fallthru
        _
      %p166 = scmp.lt.s32.totalorder %s16, 6
      // Predicated region
      $region17: #{tpu_custom_call.1} parent=5 // pred_check
        %p167 = pneg %p166
      $region18: #{tpu_custom_call.1} parent=5 // pred_check_branch
        %169 = sbr.rel (%p167) target = $region20
      $region19: #{tpu_custom_call.1} parent=5 // pred_region
        // Predicated region
        $region21: #{tpu_custom_call.1} parent=19 // pred_check
          %p170 = pneg %p74
        $region22: #{tpu_custom_call.1} parent=19 // pred_check_branch
          %172 = sbr.rel (%p170) target = $region24
        $region23: #{tpu_custom_call.1} parent=19 // pred_region
          %s173 = sand.u32 %s16, 1
          %s174 = scalar_lea.sflag [#allocation6], %s173
          %s175 = sand.u32 %s64, 1
          %s176 = smul.addr %s175, 1152
          %s177 = scalar_lea.vmem [#allocation5], %s176
          %s178 = smul.u32 3, %s24
          %s180 = ssub.s32 18432, 18432
          %181 = vsyncadd %s174, %s180
          %s182 = smul.addr %s178, 64
          %s183 = scalar_lea.hbm %s1, %s182
          %s184 = sshll.u32 %s177, 4
          %s185 = int_to_ptr.vmem [resolvable:$true] %s184
          %190 = dma.hbm_to_vmem [thread:$0]  %s183, 18432, %s185, %s174, 1152, 192, 12
        $region24: #{tpu_custom_call.1} parent=19 // pred_fallthru
          _
        // Predicated region
        $region25: #{tpu_custom_call.1} parent=19 // pred_check
          %p191 = pneg %p100
        $region26: #{tpu_custom_call.1} parent=19 // pred_check_branch
          %193 = sbr.rel (%p191) target = $region28
        $region27: #{tpu_custom_call.1} parent=19 // pred_region
          %s194 = sand.u32 %s16, 1
          %s195 = scalar_lea.sflag [#allocation6], %s194
          %s196 = sand.u32 %s90, 1
          %s197 = smul.addr %s196, 3
          %s198 = scalar_lea.vmem [#allocation7], %s197
          %s199 = smul.u32 3, %s24
          %s201 = ssub.s32 48, 48
          %202 = vsyncadd %s195, %s201
          %s203 = smul.addr %s199, 16
          %s204 = scalar_lea.hbm %s2, %s203
          %s206 = sshll.u32 %s198, 4
          %s207 = int_to_ptr.vmem [resolvable:$true] %s206
          %209 = dma.hbm_to_vmem [thread:$0]  %s204, 48, %s207, %s195
        $region28: #{tpu_custom_call.1} parent=19 // pred_fallthru
          _
      $region20: #{tpu_custom_call.1} parent=5 // pred_fallthru
        _
      %p210 = scmp.le.s32.totalorder 1, %s16
      %p211 = scmp.lt.s32.totalorder %s16, 7
      %p212 = pnand %p210, %p211
      %p213 = pneg %p212
      // Predicated region
      $region29: #{tpu_custom_call.1} parent=5 // pred_check
        _
      $region30: #{tpu_custom_call.1} parent=5 // pred_check_branch
        %215 = sbr.rel (%p212) target = $region32
      $region31: #{tpu_custom_call.1} parent=5 // pred_region
        %s216 = ssub.s32 %s16, 1
        // Predicated region
        $region33: #{tpu_custom_call.1} parent=31 // pred_check
          %p217 = pneg %p54
        $region34: #{tpu_custom_call.1} parent=31 // pred_check_branch
          %219 = sbr.rel (%p217) target = $region36
        $region35: #{tpu_custom_call.1} parent=31 // pred_region
          %220 = dma.done [#allocation3], 768
        $region36: #{tpu_custom_call.1} parent=31 // pred_fallthru
          _
        %s221 = sand.u32 %s21, 1
        %s222 = scalar_lea.sflag [#allocation6], %s221
        %s223 = sand.u32 %s67, 1
        %s224 = smul.addr %s223, 1152
        %s225 = scalar_lea.vmem [#allocation5], %s224
        // Predicated region
        $region37: #{tpu_custom_call.1} parent=31 // pred_check
          %p226 = pneg %p80
        $region38: #{tpu_custom_call.1} parent=31 // pred_check_branch
          %228 = sbr.rel (%p226) target = $region40
        $region39: #{tpu_custom_call.1} parent=31 // pred_region
          %229 = dma.done %s222, 18432
        $region40: #{tpu_custom_call.1} parent=31 // pred_fallthru
          _
        %s230 = sand.u32 %s21, 1
        %s231 = scalar_lea.sflag [#allocation6], %s230
        %s232 = sand.u32 %s93, 1
        %s233 = smul.addr %s232, 3
        %s234 = scalar_lea.vmem [#allocation7], %s233
        // Predicated region
        $region41: #{tpu_custom_call.1} parent=31 // pred_check
          %p235 = pneg %p106
        $region42: #{tpu_custom_call.1} parent=31 // pred_check_branch
          %237 = sbr.rel (%p235) target = $region44
        $region43: #{tpu_custom_call.1} parent=31 // pred_region
          %238 = dma.done %s231, 48
        $region44: #{tpu_custom_call.1} parent=31 // pred_fallthru
          _
        %p239 = pneg %p54
        %p240 = pneg %p51
        %s241 = sand.u32 %s21, 1
        %s242 = scalar_lea.sflag [#allocation6], %s241
        %s243 = sand.u32 %s67, 1
        %s244 = smul.addr %s243, 1152
        %s245 = scalar_lea.vmem [#allocation5], %s244
        %p246 = pneg %p80
        %p247 = pneg %p77
        %s248 = sand.u32 %s21, 1
        %s249 = scalar_lea.sflag [#allocation6], %s248
        %s250 = sand.u32 %s93, 1
        %s251 = smul.addr %s250, 3
        %s252 = scalar_lea.vmem [#allocation7], %s251
        %p253 = pneg %p106
        %p254 = pneg %p103
        %p255 = pneg %p134
        %p256 = pneg %p131
        %s257 = sand.u32 %s121, 1
        %s258 = scalar_lea.sflag [#allocation4], %s257
        %s259 = sand.u32 %s121, 1
        %s260 = smul.addr %s259, 24
        %s261 = scalar_lea.vmem [#allocation8], %s260
        %s262 = smul.u32 2, %s25
        %s263 = smul.u32 3, %s26
        %s264 = smul.u32 3, %s26
        %s265 = smul.u32 2, %s25
        %s266 = smul.u32 3, %s26
        %v268 = vld [vmem:[#allocation2] sm:$0xff]
        %v269 = vld [vmem:[#allocation2 + $0x8] sm:$0xff]
        %v270 = vld [vmem:[#allocation2 + $0x10] sm:$0xff]
        %v271 = vld [vmem:[#allocation2 + $0x18] sm:$0xff]
        %v272 = vld [vmem:[#allocation2 + $0x20] sm:$0xff]
        %v273 = vld [vmem:[#allocation2 + $0x28] sm:$0xff]
        %v274 = vld [vmem:[%s225] sm:$0xff]
        %v275 = vld [vmem:[%s225 + $0x8] sm:$0xf]
        %v276 = vld [vmem:[%s225 + $0xc] sm:$0xff]
        %v277 = vld [vmem:[%s225 + $0x14] sm:$0xf]
        %v278 = vld [vmem:[%s225 + $0x18] sm:$0xff]
        %v279 = vld [vmem:[%s225 + $0x20] sm:$0xf]
        %v280 = vld [vmem:[%s225 + $0x24] sm:$0xff]
        %v281 = vld [vmem:[%s225 + $0x2c] sm:$0xf]
        %v282 = vld [vmem:[%s225 + $0x30] sm:$0xff]
        %v283 = vld [vmem:[%s225 + $0x38] sm:$0xf]
        %v284 = vld [vmem:[%s225 + $0x3c] sm:$0xff]
        %v285 = vld [vmem:[%s225 + $0x44] sm:$0xf]
        %v286 = vld [vmem:[%s225 + $0x48] sm:$0xff]
        %v287 = vld [vmem:[%s225 + $0x50] sm:$0xf]
        %v288 = vld [vmem:[%s225 + $0x54] sm:$0xff]
        %v289 = vld [vmem:[%s225 + $0x5c] sm:$0xf]
        %v290 = vld [vmem:[%s225 + $0x60] sm:$0xff]
        %v291 = vld [vmem:[%s225 + $0x68] sm:$0xf]
        %v292 = vld [vmem:[%s225 + $0x6c] sm:$0xff]
        %v293 = vld [vmem:[%s225 + $0x74] sm:$0xf]
        %v294 = vld [vmem:[%s225 + $0x78] sm:$0xff]
        %v295 = vld [vmem:[%s225 + $0x80] sm:$0xf]
        %v296 = vld [vmem:[%s225 + $0x84] sm:$0xff]
        %v297 = vld [vmem:[%s225 + $0x8c] sm:$0xf]
        %v298 = vld [vmem:[%s225 + $0x90] sm:$0xff]
        %v299 = vld [vmem:[%s225 + $0x98] sm:$0xf]
        %v300 = vld [vmem:[%s225 + $0x9c] sm:$0xff]
        %v301 = vld [vmem:[%s225 + $0xa4] sm:$0xf]
        %v302 = vld [vmem:[%s225 + $0xa8] sm:$0xff]
        %v303 = vld [vmem:[%s225 + $0xb0] sm:$0xf]
        %v304 = vld [vmem:[%s225 + $0xb4] sm:$0xff]
        %v305 = vld [vmem:[%s225 + $0xbc] sm:$0xf]
        %v306 = vld [vmem:[%s225 + $0xc0] sm:$0xff]
        %v307 = vld [vmem:[%s225 + $0xc8] sm:$0xf]
        %v308 = vld [vmem:[%s225 + $0xcc] sm:$0xff]
        %v309 = vld [vmem:[%s225 + $0xd4] sm:$0xf]
        %v310 = vld [vmem:[%s225 + $0xd8] sm:$0xff]
        %v311 = vld [vmem:[%s225 + $0xe0] sm:$0xf]
        %v312 = vld [vmem:[%s225 + $0xe4] sm:$0xff]
        %v313 = vld [vmem:[%s225 + $0xec] sm:$0xf]
        %v314 = vld [vmem:[%s225 + $0xf0] sm:$0xff]
        %v315 = vld [vmem:[%s225 + $0xf8] sm:$0xf]
        %v316 = vld [vmem:[%s225 + $0xfc] sm:$0xff]
        %v317 = vld [vmem:[%s225 + $0x104] sm:$0xf]
        %v318 = vld [vmem:[%s225 + $0x108] sm:$0xff]
        %v319 = vld [vmem:[%s225 + $0x110] sm:$0xf]
        %v320 = vld [vmem:[%s225 + $0x114] sm:$0xff]
        %v321 = vld [vmem:[%s225 + $0x11c] sm:$0xf]
        %v322 = vld [vmem:[%s225 + $0x120] sm:$0xff]
        %v323 = vld [vmem:[%s225 + $0x128] sm:$0xf]
        %v324 = vld [vmem:[%s225 + $0x12c] sm:$0xff]
        %v325 = vld [vmem:[%s225 + $0x134] sm:$0xf]
        %v326 = vld [vmem:[%s225 + $0x138] sm:$0xff]
        %v327 = vld [vmem:[%s225 + $0x140] sm:$0xf]
        %v328 = vld [vmem:[%s225 + $0x144] sm:$0xff]
        %v329 = vld [vmem:[%s225 + $0x14c] sm:$0xf]
        %v330 = vld [vmem:[%s225 + $0x150] sm:$0xff]
        %v331 = vld [vmem:[%s225 + $0x158] sm:$0xf]
        %v332 = vld [vmem:[%s225 + $0x15c] sm:$0xff]
        %v333 = vld [vmem:[%s225 + $0x164] sm:$0xf]
        %v334 = vld [vmem:[%s225 + $0x168] sm:$0xff]
        %v335 = vld [vmem:[%s225 + $0x170] sm:$0xf]
        %v336 = vld [vmem:[%s225 + $0x174] sm:$0xff]
        %v337 = vld [vmem:[%s225 + $0x17c] sm:$0xf]
        %v338 = vld [vmem:[%s225 + $0x180] sm:$0xff]
        %v339 = vld [vmem:[%s225 + $0x188] sm:$0xf]
        %v340 = vld [vmem:[%s225 + $0x18c] sm:$0xff]
        %v341 = vld [vmem:[%s225 + $0x194] sm:$0xf]
        %v342 = vld [vmem:[%s225 + $0x198] sm:$0xff]
        %v343 = vld [vmem:[%s225 + $0x1a0] sm:$0xf]
        %v344 = vld [vmem:[%s225 + $0x1a4] sm:$0xff]
        %v345 = vld [vmem:[%s225 + $0x1ac] sm:$0xf]
        %v346 = vld [vmem:[%s225 + $0x1b0] sm:$0xff]
        %v347 = vld [vmem:[%s225 + $0x1b8] sm:$0xf]
        %v348 = vld [vmem:[%s225 + $0x1bc] sm:$0xff]
        %v349 = vld [vmem:[%s225 + $0x1c4] sm:$0xf]
        %v350 = vld [vmem:[%s225 + $0x1c8] sm:$0xff]
        %v351 = vld [vmem:[%s225 + $0x1d0] sm:$0xf]
        %v352 = vld [vmem:[%s225 + $0x1d4] sm:$0xff]
        %v353 = vld [vmem:[%s225 + $0x1dc] sm:$0xf]
        %v354 = vld [vmem:[%s225 + $0x1e0] sm:$0xff]
        %v355 = vld [vmem:[%s225 + $0x1e8] sm:$0xf]
        %v356 = vld [vmem:[%s225 + $0x1ec] sm:$0xff]
        %v357 = vld [vmem:[%s225 + $0x1f4] sm:$0xf]
        %v358 = vld [vmem:[%s225 + $0x1f8] sm:$0xff]
        %v359 = vld [vmem:[%s225 + $0x200] sm:$0xf]
        %v360 = vld [vmem:[%s225 + $0x204] sm:$0xff]
        %v361 = vld [vmem:[%s225 + $0x20c] sm:$0xf]
        %v362 = vld [vmem:[%s225 + $0x210] sm:$0xff]
        %v363 = vld [vmem:[%s225 + $0x218] sm:$0xf]
        %v364 = vld [vmem:[%s225 + $0x21c] sm:$0xff]
        %v365 = vld [vmem:[%s225 + $0x224] sm:$0xf]
        %v366 = vld [vmem:[%s225 + $0x228] sm:$0xff]
        %v367 = vld [vmem:[%s225 + $0x230] sm:$0xf]
        %v368 = vld [vmem:[%s225 + $0x234] sm:$0xff]
        %v369 = vld [vmem:[%s225 + $0x23c] sm:$0xf]
        %v370 = vld [vmem:[%s225 + $0x240] sm:$0xff]
        %v371 = vld [vmem:[%s225 + $0x248] sm:$0xf]
        %v372 = vld [vmem:[%s225 + $0x24c] sm:$0xff]
        %v373 = vld [vmem:[%s225 + $0x254] sm:$0xf]
        %v374 = vld [vmem:[%s225 + $0x258] sm:$0xff]
        %v375 = vld [vmem:[%s225 + $0x260] sm:$0xf]
        %v376 = vld [vmem:[%s225 + $0x264] sm:$0xff]
        %v377 = vld [vmem:[%s225 + $0x26c] sm:$0xf]
        %v378 = vld [vmem:[%s225 + $0x270] sm:$0xff]
        %v379 = vld [vmem:[%s225 + $0x278] sm:$0xf]
        %v380 = vld [vmem:[%s225 + $0x27c] sm:$0xff]
        %v381 = vld [vmem:[%s225 + $0x284] sm:$0xf]
        %v382 = vld [vmem:[%s225 + $0x288] sm:$0xff]
        %v383 = vld [vmem:[%s225 + $0x290] sm:$0xf]
        %v384 = vld [vmem:[%s225 + $0x294] sm:$0xff]
        %v385 = vld [vmem:[%s225 + $0x29c] sm:$0xf]
        %v386 = vld [vmem:[%s225 + $0x2a0] sm:$0xff]
        %v387 = vld [vmem:[%s225 + $0x2a8] sm:$0xf]
        %v388 = vld [vmem:[%s225 + $0x2ac] sm:$0xff]
        %v389 = vld [vmem:[%s225 + $0x2b4] sm:$0xf]
        %v390 = vld [vmem:[%s225 + $0x2b8] sm:$0xff]
        %v391 = vld [vmem:[%s225 + $0x2c0] sm:$0xf]
        %v392 = vld [vmem:[%s225 + $0x2c4] sm:$0xff]
        %v393 = vld [vmem:[%s225 + $0x2cc] sm:$0xf]
        %v394 = vld [vmem:[%s225 + $0x2d0] sm:$0xff]
        %v395 = vld [vmem:[%s225 + $0x2d8] sm:$0xf]
        %v396 = vld [vmem:[%s225 + $0x2dc] sm:$0xff]
        %v397 = vld [vmem:[%s225 + $0x2e4] sm:$0xf]
        %v398 = vld [vmem:[%s225 + $0x2e8] sm:$0xff]
        %v399 = vld [vmem:[%s225 + $0x2f0] sm:$0xf]
        %v400 = vld [vmem:[%s225 + $0x2f4] sm:$0xff]
        %v401 = vld [vmem:[%s225 + $0x2fc] sm:$0xf]
        %v402 = vld [vmem:[%s225 + $0x300] sm:$0xff]
        %v403 = vld [vmem:[%s225 + $0x308] sm:$0xf]
        %v404 = vld [vmem:[%s225 + $0x30c] sm:$0xff]
        %v405 = vld [vmem:[%s225 + $0x314] sm:$0xf]
        %v406 = vld [vmem:[%s225 + $0x318] sm:$0xff]
        %v407 = vld [vmem:[%s225 + $0x320] sm:$0xf]
        %v408 = vld [vmem:[%s225 + $0x324] sm:$0xff]
        %v409 = vld [vmem:[%s225 + $0x32c] sm:$0xf]
        %v410 = vld [vmem:[%s225 + $0x330] sm:$0xff]
        %v411 = vld [vmem:[%s225 + $0x338] sm:$0xf]
        %v412 = vld [vmem:[%s225 + $0x33c] sm:$0xff]
        %v413 = vld [vmem:[%s225 + $0x344] sm:$0xf]
        %v414 = vld [vmem:[%s225 + $0x348] sm:$0xff]
        %v415 = vld [vmem:[%s225 + $0x350] sm:$0xf]
        %v416 = vld [vmem:[%s225 + $0x354] sm:$0xff]
        %v417 = vld [vmem:[%s225 + $0x35c] sm:$0xf]
        %v418 = vld [vmem:[%s225 + $0x360] sm:$0xff]
        %v419 = vld [vmem:[%s225 + $0x368] sm:$0xf]
        %v420 = vld [vmem:[%s225 + $0x36c] sm:$0xff]
        %v421 = vld [vmem:[%s225 + $0x374] sm:$0xf]
        %v422 = vld [vmem:[%s225 + $0x378] sm:$0xff]
        %v423 = vld [vmem:[%s225 + $0x380] sm:$0xf]
        %v424 = vld [vmem:[%s225 + $0x384] sm:$0xff]
        %v425 = vld [vmem:[%s225 + $0x38c] sm:$0xf]
        %v426 = vld [vmem:[%s225 + $0x390] sm:$0xff]
        %v427 = vld [vmem:[%s225 + $0x398] sm:$0xf]
        %v428 = vld [vmem:[%s225 + $0x39c] sm:$0xff]
        %v429 = vld [vmem:[%s225 + $0x3a4] sm:$0xf]
        %v430 = vld [vmem:[%s225 + $0x3a8] sm:$0xff]
        %v431 = vld [vmem:[%s225 + $0x3b0] sm:$0xf]
        %v432 = vld [vmem:[%s225 + $0x3b4] sm:$0xff]
        %v433 = vld [vmem:[%s225 + $0x3bc] sm:$0xf]
        %v434 = vld [vmem:[%s225 + $0x3c0] sm:$0xff]
        %v435 = vld [vmem:[%s225 + $0x3c8] sm:$0xf]
        %v436 = vld [vmem:[%s225 + $0x3cc] sm:$0xff]
        %v437 = vld [vmem:[%s225 + $0x3d4] sm:$0xf]
        %v438 = vld [vmem:[%s225 + $0x3d8] sm:$0xff]
        %v439 = vld [vmem:[%s225 + $0x3e0] sm:$0xf]
        %v440 = vld [vmem:[%s225 + $0x3e4] sm:$0xff]
        %v441 = vld [vmem:[%s225 + $0x3ec] sm:$0xf]
        %v442 = vld [vmem:[%s225 + $0x3f0] sm:$0xff]
        %v443 = vld [vmem:[%s225 + $0x3f8] sm:$0xf]
        %v444 = vld [vmem:[%s225 + $0x3fc] sm:$0xff]
        %v445 = vld [vmem:[%s225 + $0x404] sm:$0xf]
        %v446 = vld [vmem:[%s225 + $0x408] sm:$0xff]
        %v447 = vld [vmem:[%s225 + $0x410] sm:$0xf]
        %v448 = vld [vmem:[%s225 + $0x414] sm:$0xff]
        %v449 = vld [vmem:[%s225 + $0x41c] sm:$0xf]
        %v450 = vld [vmem:[%s225 + $0x420] sm:$0xff]
        %v451 = vld [vmem:[%s225 + $0x428] sm:$0xf]
        %v452 = vld [vmem:[%s225 + $0x42c] sm:$0xff]
        %v453 = vld [vmem:[%s225 + $0x434] sm:$0xf]
        %v454 = vld [vmem:[%s225 + $0x438] sm:$0xff]
        %v455 = vld [vmem:[%s225 + $0x440] sm:$0xf]
        %v456 = vld [vmem:[%s225 + $0x444] sm:$0xff]
        %v457 = vld [vmem:[%s225 + $0x44c] sm:$0xf]
        %v458 = vld [vmem:[%s225 + $0x450] sm:$0xff]
        %v459 = vld [vmem:[%s225 + $0x458] sm:$0xf]
        %v460 = vld [vmem:[%s225 + $0x45c] sm:$0xff]
        %v461 = vld [vmem:[%s225 + $0x464] sm:$0xf]
        %v462 = vld [vmem:[%s225 + $0x468] sm:$0xff]
        %v463 = vld [vmem:[%s225 + $0x470] sm:$0xf]
        %v464 = vld [vmem:[%s225 + $0x474] sm:$0xff]
        %v465 = vld [vmem:[%s225 + $0x47c] sm:$0xf]
        %v466 = vld [vmem:[%s234] sm:$0x7]
        %v468 = vlaneseq
        %v469 = vshrl.u32 %v468, 7
        %v470 = vsub.s32 0, %v469
        %v471 = vrot.slane %v466, %v470
        %v472 = vlaneseq
        %v473 = vshrl.u32 %v472, 7
        %v474 = vsub.s32 1, %v473
        %v475 = vrot.slane %v466, %v474
        %v476 = vlaneseq
        %v477 = vshrl.u32 %v476, 7
        %v478 = vsub.s32 2, %v477
        %v479 = vrot.slane %v466, %v478
        %v489 = vunpack.c.l.b16 %v268
        %v490 = vunpack.c.h.b16 %v268
        %v491 = vunpack.c.l.b16 %v269
        %v492 = vunpack.c.h.b16 %v269
        %v493 = vunpack.c.l.b16 %v270
        %v494 = vunpack.c.h.b16 %v270
        %v495 = vunpack.c.l.b16 %v271
        %v496 = vunpack.c.h.b16 %v271
        %v497 = vunpack.c.l.b16 %v272
        %v498 = vunpack.c.h.b16 %v272
        %v499 = vunpack.c.l.b16 %v273
        %v500 = vunpack.c.h.b16 %v273
        %v501 = vpack.c.b16 %v495, %v489
        %v502 = vpack.c.b16 %v496, %v490
        %v503 = vpack.c.b16 %v497, %v491
        %v504 = vpack.c.b16 %v498, %v492
        %v505 = vpack.c.b16 %v499, %v493
        %v506 = vpack.c.b16 %v500, %v494
        %v705 = vunpack.c.l.b16 %v274
        %v706 = vunpack.c.h.b16 %v274
        %v707 = vunpack.c.l.b16 %v275
        %v708 = vunpack.c.l.b16 %v276
        %v709 = vunpack.c.h.b16 %v276
        %v710 = vunpack.c.l.b16 %v277
        %v711 = vunpack.c.l.b16 %v278
        %v712 = vunpack.c.h.b16 %v278
        %v713 = vunpack.c.l.b16 %v279
        %v714 = vunpack.c.l.b16 %v280
        %v715 = vunpack.c.h.b16 %v280
        %v716 = vunpack.c.l.b16 %v281
        %v717 = vunpack.c.l.b16 %v282
        %v718 = vunpack.c.h.b16 %v282
        %v719 = vunpack.c.l.b16 %v283
        %v720 = vunpack.c.l.b16 %v284
        %v721 = vunpack.c.h.b16 %v284
        %v722 = vunpack.c.l.b16 %v285
        %v723 = vunpack.c.l.b16 %v286
        %v724 = vunpack.c.h.b16 %v286
        %v725 = vunpack.c.l.b16 %v287
        %v726 = vunpack.c.l.b16 %v288
        %v727 = vunpack.c.h.b16 %v288
        %v728 = vunpack.c.l.b16 %v289
        %v729 = vunpack.c.l.b16 %v290
        %v730 = vunpack.c.h.b16 %v290
        %v731 = vunpack.c.l.b16 %v291
        %v732 = vunpack.c.l.b16 %v292
        %v733 = vunpack.c.h.b16 %v292
        %v734 = vunpack.c.l.b16 %v293
        %v735 = vunpack.c.l.b16 %v294
        %v736 = vunpack.c.h.b16 %v294
        %v737 = vunpack.c.l.b16 %v295
        %v738 = vunpack.c.l.b16 %v296
        %v739 = vunpack.c.h.b16 %v296
        %v740 = vunpack.c.l.b16 %v297
        %v741 = vunpack.c.l.b16 %v298
        %v742 = vunpack.c.h.b16 %v298
        %v743 = vunpack.c.l.b16 %v299
        %v744 = vunpack.c.l.b16 %v300
        %v745 = vunpack.c.h.b16 %v300
        %v746 = vunpack.c.l.b16 %v301
        %v747 = vunpack.c.l.b16 %v302
        %v748 = vunpack.c.h.b16 %v302
        %v749 = vunpack.c.l.b16 %v303
        %v750 = vunpack.c.l.b16 %v304
        %v751 = vunpack.c.h.b16 %v304
        %v752 = vunpack.c.l.b16 %v305
        %v753 = vunpack.c.l.b16 %v306
        %v754 = vunpack.c.h.b16 %v306
        %v755 = vunpack.c.l.b16 %v307
        %v756 = vunpack.c.l.b16 %v308
        %v757 = vunpack.c.h.b16 %v308
        %v758 = vunpack.c.l.b16 %v309
        %v759 = vunpack.c.l.b16 %v310
        %v760 = vunpack.c.h.b16 %v310
        %v761 = vunpack.c.l.b16 %v311
        %v762 = vunpack.c.l.b16 %v312
        %v763 = vunpack.c.h.b16 %v312
        %v764 = vunpack.c.l.b16 %v313
        %v765 = vunpack.c.l.b16 %v314
        %v766 = vunpack.c.h.b16 %v314
        %v767 = vunpack.c.l.b16 %v315
        %v768 = vunpack.c.l.b16 %v316
        %v769 = vunpack.c.h.b16 %v316
        %v770 = vunpack.c.l.b16 %v317
        %v771 = vunpack.c.l.b16 %v318
        %v772 = vunpack.c.h.b16 %v318
        %v773 = vunpack.c.l.b16 %v319
        %v774 = vunpack.c.l.b16 %v320
        %v775 = vunpack.c.h.b16 %v320
        %v776 = vunpack.c.l.b16 %v321
        %v777 = vunpack.c.l.b16 %v322
        %v778 = vunpack.c.h.b16 %v322
        %v779 = vunpack.c.l.b16 %v323
        %v780 = vunpack.c.l.b16 %v324
        %v781 = vunpack.c.h.b16 %v324
        %v782 = vunpack.c.l.b16 %v325
        %v783 = vunpack.c.l.b16 %v326
        %v784 = vunpack.c.h.b16 %v326
        %v785 = vunpack.c.l.b16 %v327
        %v786 = vunpack.c.l.b16 %v328
        %v787 = vunpack.c.h.b16 %v328
        %v788 = vunpack.c.l.b16 %v329
        %v789 = vunpack.c.l.b16 %v330
        %v790 = vunpack.c.h.b16 %v330
        %v791 = vunpack.c.l.b16 %v331
        %v792 = vunpack.c.l.b16 %v332
        %v793 = vunpack.c.h.b16 %v332
        %v794 = vunpack.c.l.b16 %v333
        %v795 = vunpack.c.l.b16 %v334
        %v796 = vunpack.c.h.b16 %v334
        %v797 = vunpack.c.l.b16 %v335
        %v798 = vunpack.c.l.b16 %v336
        %v799 = vunpack.c.h.b16 %v336
        %v800 = vunpack.c.l.b16 %v337
        %v801 = vunpack.c.l.b16 %v338
        %v802 = vunpack.c.h.b16 %v338
        %v803 = vunpack.c.l.b16 %v339
        %v804 = vunpack.c.l.b16 %v340
        %v805 = vunpack.c.h.b16 %v340
        %v806 = vunpack.c.l.b16 %v341
        %v807 = vunpack.c.l.b16 %v342
        %v808 = vunpack.c.h.b16 %v342
        %v809 = vunpack.c.l.b16 %v343
        %v810 = vunpack.c.l.b16 %v344
        %v811 = vunpack.c.h.b16 %v344
        %v812 = vunpack.c.l.b16 %v345
        %v813 = vunpack.c.l.b16 %v346
        %v814 = vunpack.c.h.b16 %v346
        %v815 = vunpack.c.l.b16 %v347
        %v816 = vunpack.c.l.b16 %v348
        %v817 = vunpack.c.h.b16 %v348
        %v818 = vunpack.c.l.b16 %v349
        %v819 = vunpack.c.l.b16 %v350
        %v820 = vunpack.c.h.b16 %v350
        %v821 = vunpack.c.l.b16 %v351
        %v822 = vunpack.c.l.b16 %v352
        %v823 = vunpack.c.h.b16 %v352
        %v824 = vunpack.c.l.b16 %v353
        %v825 = vunpack.c.l.b16 %v354
        %v826 = vunpack.c.h.b16 %v354
        %v827 = vunpack.c.l.b16 %v355
        %v828 = vunpack.c.l.b16 %v356
        %v829 = vunpack.c.h.b16 %v356
        %v830 = vunpack.c.l.b16 %v357
        %v831 = vunpack.c.l.b16 %v358
        %v832 = vunpack.c.h.b16 %v358
        %v833 = vunpack.c.l.b16 %v359
        %v834 = vunpack.c.l.b16 %v360
        %v835 = vunpack.c.h.b16 %v360
        %v836 = vunpack.c.l.b16 %v361
        %v837 = vunpack.c.l.b16 %v362
        %v838 = vunpack.c.h.b16 %v362
        %v839 = vunpack.c.l.b16 %v363
        %v840 = vunpack.c.l.b16 %v364
        %v841 = vunpack.c.h.b16 %v364
        %v842 = vunpack.c.l.b16 %v365
        %v843 = vunpack.c.l.b16 %v366
        %v844 = vunpack.c.h.b16 %v366
        %v845 = vunpack.c.l.b16 %v367
        %v846 = vunpack.c.l.b16 %v368
        %v847 = vunpack.c.h.b16 %v368
        %v848 = vunpack.c.l.b16 %v369
        %v849 = vunpack.c.l.b16 %v370
        %v850 = vunpack.c.h.b16 %v370
        %v851 = vunpack.c.l.b16 %v371
        %v852 = vunpack.c.l.b16 %v372
        %v853 = vunpack.c.h.b16 %v372
        %v854 = vunpack.c.l.b16 %v373
        %v855 = vunpack.c.l.b16 %v374
        %v856 = vunpack.c.h.b16 %v374
        %v857 = vunpack.c.l.b16 %v375
        %v858 = vunpack.c.l.b16 %v376
        %v859 = vunpack.c.h.b16 %v376
        %v860 = vunpack.c.l.b16 %v377
        %v861 = vunpack.c.l.b16 %v378
        %v862 = vunpack.c.h.b16 %v378
        %v863 = vunpack.c.l.b16 %v379
        %v864 = vunpack.c.l.b16 %v380
        %v865 = vunpack.c.h.b16 %v380
        %v866 = vunpack.c.l.b16 %v381
        %v867 = vunpack.c.l.b16 %v382
        %v868 = vunpack.c.h.b16 %v382
        %v869 = vunpack.c.l.b16 %v383
        %v870 = vunpack.c.l.b16 %v384
        %v871 = vunpack.c.h.b16 %v384
        %v872 = vunpack.c.l.b16 %v385
        %v873 = vunpack.c.l.b16 %v386
        %v874 = vunpack.c.h.b16 %v386
        %v875 = vunpack.c.l.b16 %v387
        %v876 = vunpack.c.l.b16 %v388
        %v877 = vunpack.c.h.b16 %v388
        %v878 = vunpack.c.l.b16 %v389
        %v879 = vunpack.c.l.b16 %v390
        %v880 = vunpack.c.h.b16 %v390
        %v881 = vunpack.c.l.b16 %v391
        %v882 = vunpack.c.l.b16 %v392
        %v883 = vunpack.c.h.b16 %v392
        %v884 = vunpack.c.l.b16 %v393
        %v885 = vunpack.c.l.b16 %v394
        %v886 = vunpack.c.h.b16 %v394
        %v887 = vunpack.c.l.b16 %v395
        %v888 = vunpack.c.l.b16 %v396
        %v889 = vunpack.c.h.b16 %v396
        %v890 = vunpack.c.l.b16 %v397
        %v891 = vunpack.c.l.b16 %v398
        %v892 = vunpack.c.h.b16 %v398
        %v893 = vunpack.c.l.b16 %v399
        %v894 = vunpack.c.l.b16 %v400
        %v895 = vunpack.c.h.b16 %v400
        %v896 = vunpack.c.l.b16 %v401
        %v897 = vunpack.c.l.b16 %v402
        %v898 = vunpack.c.h.b16 %v402
        %v899 = vunpack.c.l.b16 %v403
        %v900 = vunpack.c.l.b16 %v404
        %v901 = vunpack.c.h.b16 %v404
        %v902 = vunpack.c.l.b16 %v405
        %v903 = vunpack.c.l.b16 %v406
        %v904 = vunpack.c.h.b16 %v406
        %v905 = vunpack.c.l.b16 %v407
        %v906 = vunpack.c.l.b16 %v408
        %v907 = vunpack.c.h.b16 %v408
        %v908 = vunpack.c.l.b16 %v409
        %v909 = vunpack.c.l.b16 %v410
        %v910 = vunpack.c.h.b16 %v410
        %v911 = vunpack.c.l.b16 %v411
        %v912 = vunpack.c.l.b16 %v412
        %v913 = vunpack.c.h.b16 %v412
        %v914 = vunpack.c.l.b16 %v413
        %v915 = vunpack.c.l.b16 %v414
        %v916 = vunpack.c.h.b16 %v414
        %v917 = vunpack.c.l.b16 %v415
        %v918 = vunpack.c.l.b16 %v416
        %v919 = vunpack.c.h.b16 %v416
        %v920 = vunpack.c.l.b16 %v417
        %v921 = vunpack.c.l.b16 %v418
        %v922 = vunpack.c.h.b16 %v418
        %v923 = vunpack.c.l.b16 %v419
        %v924 = vunpack.c.l.b16 %v420
        %v925 = vunpack.c.h.b16 %v420
        %v926 = vunpack.c.l.b16 %v421
        %v927 = vunpack.c.l.b16 %v422
        %v928 = vunpack.c.h.b16 %v422
        %v929 = vunpack.c.l.b16 %v423
        %v930 = vunpack.c.l.b16 %v424
        %v931 = vunpack.c.h.b16 %v424
        %v932 = vunpack.c.l.b16 %v425
        %v933 = vunpack.c.l.b16 %v426
        %v934 = vunpack.c.h.b16 %v426
        %v935 = vunpack.c.l.b16 %v427
        %v936 = vunpack.c.l.b16 %v428
        %v937 = vunpack.c.h.b16 %v428
        %v938 = vunpack.c.l.b16 %v429
        %v939 = vunpack.c.l.b16 %v430
        %v940 = vunpack.c.h.b16 %v430
        %v941 = vunpack.c.l.b16 %v431
        %v942 = vunpack.c.l.b16 %v432
        %v943 = vunpack.c.h.b16 %v432
        %v944 = vunpack.c.l.b16 %v433
        %v945 = vunpack.c.l.b16 %v434
        %v946 = vunpack.c.h.b16 %v434
        %v947 = vunpack.c.l.b16 %v435
        %v948 = vunpack.c.l.b16 %v436
        %v949 = vunpack.c.h.b16 %v436
        %v950 = vunpack.c.l.b16 %v437
        %v951 = vunpack.c.l.b16 %v438
        %v952 = vunpack.c.h.b16 %v438
        %v953 = vunpack.c.l.b16 %v439
        %v954 = vunpack.c.l.b16 %v440
        %v955 = vunpack.c.h.b16 %v440
        %v956 = vunpack.c.l.b16 %v441
        %v957 = vunpack.c.l.b16 %v442
        %v958 = vunpack.c.h.b16 %v442
        %v959 = vunpack.c.l.b16 %v443
        %v960 = vunpack.c.l.b16 %v444
        %v961 = vunpack.c.h.b16 %v444
        %v962 = vunpack.c.l.b16 %v445
        %v963 = vunpack.c.l.b16 %v446
        %v964 = vunpack.c.h.b16 %v446
        %v965 = vunpack.c.l.b16 %v447
        %v966 = vunpack.c.l.b16 %v448
        %v967 = vunpack.c.h.b16 %v448
        %v968 = vunpack.c.l.b16 %v449
        %v969 = vunpack.c.l.b16 %v450
        %v970 = vunpack.c.h.b16 %v450
        %v971 = vunpack.c.l.b16 %v451
        %v972 = vunpack.c.l.b16 %v452
        %v973 = vunpack.c.h.b16 %v452
        %v974 = vunpack.c.l.b16 %v453
        %v975 = vunpack.c.l.b16 %v454
        %v976 = vunpack.c.h.b16 %v454
        %v977 = vunpack.c.l.b16 %v455
        %v978 = vunpack.c.l.b16 %v456
        %v979 = vunpack.c.h.b16 %v456
        %v980 = vunpack.c.l.b16 %v457
        %v981 = vunpack.c.l.b16 %v458
        %v982 = vunpack.c.h.b16 %v458
        %v983 = vunpack.c.l.b16 %v459
        %v984 = vunpack.c.l.b16 %v460
        %v985 = vunpack.c.h.b16 %v460
        %v986 = vunpack.c.l.b16 %v461
        %v987 = vunpack.c.l.b16 %v462
        %v988 = vunpack.c.h.b16 %v462
        %v989 = vunpack.c.l.b16 %v463
        %v990 = vunpack.c.l.b16 %v464
        %v991 = vunpack.c.h.b16 %v464
        %v992 = vunpack.c.l.b16 %v465
        %v993 = vpack.c.b16 %v708, %v705
        %v994 = vpack.c.b16 %v709, %v706
        %v995 = vpack.c.b16 %v710, %v707
        %v996 = vpack.c.b16 %v714, %v711
        %v997 = vpack.c.b16 %v715, %v712
        %v998 = vpack.c.b16 %v716, %v713
        %v999 = vpack.c.b16 %v720, %v717
        %v1000 = vpack.c.b16 %v721, %v718
        %v1001 = vpack.c.b16 %v722, %v719
        %v1002 = vpack.c.b16 %v726, %v723
        %v1003 = vpack.c.b16 %v727, %v724
        %v1004 = vpack.c.b16 %v728, %v725
        %v1005 = vpack.c.b16 %v732, %v729
        %v1006 = vpack.c.b16 %v733, %v730
        %v1007 = vpack.c.b16 %v734, %v731
        %v1008 = vpack.c.b16 %v738, %v735
        %v1009 = vpack.c.b16 %v739, %v736
        %v1010 = vpack.c.b16 %v740, %v737
        %v1011 = vpack.c.b16 %v744, %v741
        %v1012 = vpack.c.b16 %v745, %v742
        %v1013 = vpack.c.b16 %v746, %v743
        %v1014 = vpack.c.b16 %v750, %v747
        %v1015 = vpack.c.b16 %v751, %v748
        %v1016 = vpack.c.b16 %v752, %v749
        %v1017 = vpack.c.b16 %v756, %v753
        %v1018 = vpack.c.b16 %v757, %v754
        %v1019 = vpack.c.b16 %v758, %v755
        %v1020 = vpack.c.b16 %v762, %v759
        %v1021 = vpack.c.b16 %v763, %v760
        %v1022 = vpack.c.b16 %v764, %v761
        %v1023 = vpack.c.b16 %v768, %v765
        %v1024 = vpack.c.b16 %v769, %v766
        %v1025 = vpack.c.b16 %v770, %v767
        %v1026 = vpack.c.b16 %v774, %v771
        %v1027 = vpack.c.b16 %v775, %v772
        %v1028 = vpack.c.b16 %v776, %v773
        %v1029 = vpack.c.b16 %v780, %v777
        %v1030 = vpack.c.b16 %v781, %v778
        %v1031 = vpack.c.b16 %v782, %v779
        %v1032 = vpack.c.b16 %v786, %v783
        %v1033 = vpack.c.b16 %v787, %v784
        %v1034 = vpack.c.b16 %v788, %v785
        %v1035 = vpack.c.b16 %v792, %v789
        %v1036 = vpack.c.b16 %v793, %v790
        %v1037 = vpack.c.b16 %v794, %v791
        %v1038 = vpack.c.b16 %v798, %v795
        %v1039 = vpack.c.b16 %v799, %v796
        %v1040 = vpack.c.b16 %v800, %v797
        %v1041 = vpack.c.b16 %v804, %v801
        %v1042 = vpack.c.b16 %v805, %v802
        %v1043 = vpack.c.b16 %v806, %v803
        %v1044 = vpack.c.b16 %v810, %v807
        %v1045 = vpack.c.b16 %v811, %v808
        %v1046 = vpack.c.b16 %v812, %v809
        %v1047 = vpack.c.b16 %v816, %v813
        %v1048 = vpack.c.b16 %v817, %v814
        %v1049 = vpack.c.b16 %v818, %v815
        %v1050 = vpack.c.b16 %v822, %v819
        %v1051 = vpack.c.b16 %v823, %v820
        %v1052 = vpack.c.b16 %v824, %v821
        %v1053 = vpack.c.b16 %v828, %v825
        %v1054 = vpack.c.b16 %v829, %v826
        %v1055 = vpack.c.b16 %v830, %v827
        %v1056 = vpack.c.b16 %v834, %v831
        %v1057 = vpack.c.b16 %v835, %v832
        %v1058 = vpack.c.b16 %v836, %v833
        %v1059 = vpack.c.b16 %v840, %v837
        %v1060 = vpack.c.b16 %v841, %v838
        %v1061 = vpack.c.b16 %v842, %v839
        %v1062 = vpack.c.b16 %v846, %v843
        %v1063 = vpack.c.b16 %v847, %v844
        %v1064 = vpack.c.b16 %v848, %v845
        %v1065 = vpack.c.b16 %v852, %v849
        %v1066 = vpack.c.b16 %v853, %v850
        %v1067 = vpack.c.b16 %v854, %v851
        %v1068 = vpack.c.b16 %v858, %v855
        %v1069 = vpack.c.b16 %v859, %v856
        %v1070 = vpack.c.b16 %v860, %v857
        %v1071 = vpack.c.b16 %v864, %v861
        %v1072 = vpack.c.b16 %v865, %v862
        %v1073 = vpack.c.b16 %v866, %v863
        %v1074 = vpack.c.b16 %v870, %v867
        %v1075 = vpack.c.b16 %v871, %v868
        %v1076 = vpack.c.b16 %v872, %v869
        %v1077 = vpack.c.b16 %v876, %v873
        %v1078 = vpack.c.b16 %v877, %v874
        %v1079 = vpack.c.b16 %v878, %v875
        %v1080 = vpack.c.b16 %v882, %v879
        %v1081 = vpack.c.b16 %v883, %v880
        %v1082 = vpack.c.b16 %v884, %v881
        %v1083 = vpack.c.b16 %v888, %v885
        %v1084 = vpack.c.b16 %v889, %v886
        %v1085 = vpack.c.b16 %v890, %v887
        %v1086 = vpack.c.b16 %v894, %v891
        %v1087 = vpack.c.b16 %v895, %v892
        %v1088 = vpack.c.b16 %v896, %v893
        %v1089 = vpack.c.b16 %v900, %v897
        %v1090 = vpack.c.b16 %v901, %v898
        %v1091 = vpack.c.b16 %v902, %v899
        %v1092 = vpack.c.b16 %v906, %v903
        %v1093 = vpack.c.b16 %v907, %v904
        %v1094 = vpack.c.b16 %v908, %v905
        %v1095 = vpack.c.b16 %v912, %v909
        %v1096 = vpack.c.b16 %v913, %v910
        %v1097 = vpack.c.b16 %v914, %v911
        %v1098 = vpack.c.b16 %v918, %v915
        %v1099 = vpack.c.b16 %v919, %v916
        %v1100 = vpack.c.b16 %v920, %v917
        %v1101 = vpack.c.b16 %v924, %v921
        %v1102 = vpack.c.b16 %v925, %v922
        %v1103 = vpack.c.b16 %v926, %v923
        %v1104 = vpack.c.b16 %v930, %v927
        %v1105 = vpack.c.b16 %v931, %v928
        %v1106 = vpack.c.b16 %v932, %v929
        %v1107 = vpack.c.b16 %v936, %v933
        %v1108 = vpack.c.b16 %v937, %v934
        %v1109 = vpack.c.b16 %v938, %v935
        %v1110 = vpack.c.b16 %v942, %v939
        %v1111 = vpack.c.b16 %v943, %v940
        %v1112 = vpack.c.b16 %v944, %v941
        %v1113 = vpack.c.b16 %v948, %v945
        %v1114 = vpack.c.b16 %v949, %v946
        %v1115 = vpack.c.b16 %v950, %v947
        %v1116 = vpack.c.b16 %v954, %v951
        %v1117 = vpack.c.b16 %v955, %v952
        %v1118 = vpack.c.b16 %v956, %v953
        %v1119 = vpack.c.b16 %v960, %v957
        %v1120 = vpack.c.b16 %v961, %v958
        %v1121 = vpack.c.b16 %v962, %v959
        %v1122 = vpack.c.b16 %v966, %v963
        %v1123 = vpack.c.b16 %v967, %v964
        %v1124 = vpack.c.b16 %v968, %v965
        %v1125 = vpack.c.b16 %v972, %v969
        %v1126 = vpack.c.b16 %v973, %v970
        %v1127 = vpack.c.b16 %v974, %v971
        %v1128 = vpack.c.b16 %v978, %v975
        %v1129 = vpack.c.b16 %v979, %v976
        %v1130 = vpack.c.b16 %v980, %v977
        %v1131 = vpack.c.b16 %v984, %v981
        %v1132 = vpack.c.b16 %v985, %v982
        %v1133 = vpack.c.b16 %v986, %v983
        %v1134 = vpack.c.b16 %v990, %v987
        %v1135 = vpack.c.b16 %v991, %v988
        %v1136 = vpack.c.b16 %v992, %v989
        %1281 = vmatprep.subr.bf16.mxu0 %v994
        %1282 = vmatpush1.bf16.msra.mxu0 %v993
        %1283 = vmatprep.subr.bf16.mxu0 %v997
        %1284 = vmatpush1.bf16.msra.mxu0 %v996
        %1285 = vmatprep.subr.bf16.mxu0 %v1000
        %1286 = vmatpush1.bf16.msra.mxu0 %v999
        %1287 = vmatprep.subr.bf16.mxu0 %v1003
        %1288 = vmatpush1.bf16.msra.mxu0 %v1002
        %1289 = vmatprep.subr.bf16.mxu0 %v1006
        %1290 = vmatpush1.bf16.msra.mxu0 %v1005
        %1291 = vmatprep.subr.bf16.mxu0 %v1009
        %1292 = vmatpush1.bf16.msra.mxu0 %v1008
        %1293 = vmatprep.subr.bf16.mxu0 %v1012
        %1294 = vmatpush1.bf16.msra.mxu0 %v1011
        %1295 = vmatprep.subr.bf16.mxu0 %v1015
        %1296 = vmatpush1.bf16.msra.mxu0 %v1014
        %1297 = vmatprep.subr.bf16.mxu0 %v1018
        %1298 = vmatpush1.bf16.msra.mxu0 %v1017
        %1299 = vmatprep.subr.bf16.mxu0 %v1021
        %1300 = vmatpush1.bf16.msra.mxu0 %v1020
        %1301 = vmatprep.subr.bf16.mxu0 %v1024
        %1302 = vmatpush1.bf16.msra.mxu0 %v1023
        %1303 = vmatprep.subr.bf16.mxu0 %v1027
        %1304 = vmatpush1.bf16.msra.mxu0 %v1026
        %1305 = vmatprep.subr.bf16.mxu0 %v1030
        %1306 = vmatpush1.bf16.msra.mxu0 %v1029
        %1307 = vmatprep.subr.bf16.mxu0 %v1033
        %1308 = vmatpush1.bf16.msra.mxu0 %v1032
        %1309 = vmatprep.subr.bf16.mxu0 %v1036
        %1310 = vmatpush1.bf16.msra.mxu0 %v1035
        %1311 = vmatprep.subr.bf16.mxu0 %v1039
        %1312 = vmatpush1.bf16.msra.mxu0 %v1038
        %1313 = vmatprep.mubr.bf16.mxu0 %v502
        %1314 = vmatmul.mubr.bf16.gmra.mrb[0].mxu0 %v501
        %v1315 = vpop.f32.mrb[0].mxu0
        %v1316 = vadd.f32 %v471, %v1315
        %v1317 = vpop.f32.mrb[0].mxu0
        %v1318 = vadd.f32 %v475, %v1317
        %v1319 = vpop.f32.mrb[0].mxu0
        %v1320 = vadd.f32 %v471, %v1319
        %v1321 = vpop.f32.mrb[0].mxu0
        %v1322 = vadd.f32 %v475, %v1321
        %1323 = vdwg.mxu0
        %1324 = vmatprep.subr.bf16.mxu0 %v1042
        %1325 = vmatpush1.bf16.msra.mxu0 %v1041
        %1326 = vmatprep.subr.bf16.mxu0 %v1045
        %1327 = vmatpush1.bf16.msra.mxu0 %v1044
        %1328 = vmatprep.subr.bf16.mxu0 %v1048
        %1329 = vmatpush1.bf16.msra.mxu0 %v1047
        %1330 = vmatprep.subr.bf16.mxu0 %v1051
        %1331 = vmatpush1.bf16.msra.mxu0 %v1050
        %1332 = vmatprep.subr.bf16.mxu0 %v1054
        %1333 = vmatpush1.bf16.msra.mxu0 %v1053
        %1334 = vmatprep.subr.bf16.mxu0 %v1057
        %1335 = vmatpush1.bf16.msra.mxu0 %v1056
        %1336 = vmatprep.subr.bf16.mxu0 %v1060
        %1337 = vmatpush1.bf16.msra.mxu0 %v1059
        %1338 = vmatprep.subr.bf16.mxu0 %v1063
        %1339 = vmatpush1.bf16.msra.mxu0 %v1062
        %1340 = vmatprep.subr.bf16.mxu0 %v1066
        %1341 = vmatpush1.bf16.msra.mxu0 %v1065
        %1342 = vmatprep.subr.bf16.mxu0 %v1069
        %1343 = vmatpush1.bf16.msra.mxu0 %v1068
        %1344 = vmatprep.subr.bf16.mxu0 %v1072
        %1345 = vmatpush1.bf16.msra.mxu0 %v1071
        %1346 = vmatprep.subr.bf16.mxu0 %v1075
        %1347 = vmatpush1.bf16.msra.mxu0 %v1074
        %1348 = vmatprep.subr.bf16.mxu0 %v1078
        %1349 = vmatpush1.bf16.msra.mxu0 %v1077
        %1350 = vmatprep.subr.bf16.mxu0 %v1081
        %1351 = vmatpush1.bf16.msra.mxu0 %v1080
        %1352 = vmatprep.subr.bf16.mxu0 %v1084
        %1353 = vmatpush1.bf16.msra.mxu0 %v1083
        %1354 = vmatprep.subr.bf16.mxu0 %v1087
        %1355 = vmatpush1.bf16.msra.mxu0 %v1086
        %1356 = vmatprep.mubr.bf16.mxu0 %v504
        %1357 = vmatmul.mubr.bf16.gmra.mrb[0].mxu0 %v503
        %v1358 = vpop.f32.mrb[0].mxu0
        %v1359 = vadd.f32 %v1316, %v1358
        %v1360 = vpop.f32.mrb[0].mxu0
        %v1361 = vadd.f32 %v1318, %v1360
        %v1362 = vpop.f32.mrb[0].mxu0
        %v1363 = vadd.f32 %v1320, %v1362
        %v1364 = vpop.f32.mrb[0].mxu0
        %v1365 = vadd.f32 %v1322, %v1364
        %1366 = vdwg.mxu0
        %1367 = vmatprep.subr.bf16.mxu0 %v1090
        %1368 = vmatpush1.bf16.msra.mxu0 %v1089
        %1369 = vmatprep.subr.bf16.mxu0 %v1093
        %1370 = vmatpush1.bf16.msra.mxu0 %v1092
        %1371 = vmatprep.subr.bf16.mxu0 %v1096
        %1372 = vmatpush1.bf16.msra.mxu0 %v1095
        %1373 = vmatprep.subr.bf16.mxu0 %v1099
        %1374 = vmatpush1.bf16.msra.mxu0 %v1098
        %1375 = vmatprep.subr.bf16.mxu0 %v1102
        %1376 = vmatpush1.bf16.msra.mxu0 %v1101
        %1377 = vmatprep.subr.bf16.mxu0 %v1105
        %1378 = vmatpush1.bf16.msra.mxu0 %v1104
        %1379 = vmatprep.subr.bf16.mxu0 %v1108
        %1380 = vmatpush1.bf16.msra.mxu0 %v1107
        %1381 = vmatprep.subr.bf16.mxu0 %v1111
        %1382 = vmatpush1.bf16.msra.mxu0 %v1110
        %1383 = vmatprep.subr.bf16.mxu0 %v1114
        %1384 = vmatpush1.bf16.msra.mxu0 %v1113
        %1385 = vmatprep.subr.bf16.mxu0 %v1117
        %1386 = vmatpush1.bf16.msra.mxu0 %v1116
        %1387 = vmatprep.subr.bf16.mxu0 %v1120
        %1388 = vmatpush1.bf16.msra.mxu0 %v1119
        %1389 = vmatprep.subr.bf16.mxu0 %v1123
        %1390 = vmatpush1.bf16.msra.mxu0 %v1122
        %1391 = vmatprep.subr.bf16.mxu0 %v1126
        %1392 = vmatpush1.bf16.msra.mxu0 %v1125
        %1393 = vmatprep.subr.bf16.mxu0 %v1129
        %1394 = vmatpush1.bf16.msra.mxu0 %v1128
        %1395 = vmatprep.subr.bf16.mxu0 %v1132
        %1396 = vmatpush1.bf16.msra.mxu0 %v1131
        %1397 = vmatprep.subr.bf16.mxu0 %v1135
        %1398 = vmatpush1.bf16.msra.mxu0 %v1134
        %1399 = vmatprep.mubr.bf16.mxu0 %v506
        %1400 = vmatmul.mubr.bf16.gmra.mrb[0].mxu0 %v505
        %v1401 = vpop.f32.mrb[0].mxu0
        %v1402 = vadd.f32 %v1359, %v1401
        %v1403 = vpop.f32.mrb[0].mxu0
        %v1404 = vadd.f32 %v1361, %v1403
        %v1405 = vpop.f32.mrb[0].mxu0
        %v1406 = vadd.f32 %v1363, %v1405
        %v1407 = vpop.f32.mrb[0].mxu0
        %v1408 = vadd.f32 %v1365, %v1407
        %1409 = vdwg.mxu0
        %1410 = vmatprep.subr.bf16.mxu0 0
        %1411 = vmatpush1.bf16.msra.mxu0 %v995
        %1412 = vmatprep.subr.bf16.mxu0 0
        %1413 = vmatpush1.bf16.msra.mxu0 %v998
        %1414 = vmatprep.subr.bf16.mxu0 0
        %1415 = vmatpush1.bf16.msra.mxu0 %v1001
        %1416 = vmatprep.subr.bf16.mxu0 0
        %1417 = vmatpush1.bf16.msra.mxu0 %v1004
        %1418 = vmatprep.subr.bf16.mxu0 0
        %1419 = vmatpush1.bf16.msra.mxu0 %v1007
        %1420 = vmatprep.subr.bf16.mxu0 0
        %1421 = vmatpush1.bf16.msra.mxu0 %v1010
        %1422 = vmatprep.subr.bf16.mxu0 0
        %1423 = vmatpush1.bf16.msra.mxu0 %v1013
        %1424 = vmatprep.subr.bf16.mxu0 0
        %1425 = vmatpush1.bf16.msra.mxu0 %v1016
        %1426 = vmatprep.subr.bf16.mxu0 0
        %1427 = vmatpush1.bf16.msra.mxu0 %v1019
        %1428 = vmatprep.subr.bf16.mxu0 0
        %1429 = vmatpush1.bf16.msra.mxu0 %v1022
        %1430 = vmatprep.subr.bf16.mxu0 0
        %1431 = vmatpush1.bf16.msra.mxu0 %v1025
        %1432 = vmatprep.subr.bf16.mxu0 0
        %1433 = vmatpush1.bf16.msra.mxu0 %v1028
        %1434 = vmatprep.subr.bf16.mxu0 0
        %1435 = vmatpush1.bf16.msra.mxu0 %v1031
        %1436 = vmatprep.subr.bf16.mxu0 0
        %1437 = vmatpush1.bf16.msra.mxu0 %v1034
        %1438 = vmatprep.subr.bf16.mxu0 0
        %1439 = vmatpush1.bf16.msra.mxu0 %v1037
        %1440 = vmatprep.subr.bf16.mxu0 0
        %1441 = vmatpush1.bf16.msra.mxu0 %v1040
        %1442 = vmatprep.mubr.bf16.mxu0 %v502
        %1443 = vmatmul.mubr.bf16.gmra.mrb[0].mxu0 %v501
        %v1444 = vpop.f32.mrb[0].mxu0
        %v1445 = vadd.f32 %v479, %v1444
        %v1446 = vpop.f32.mrb[0].mxu0
        %v1447 = vpop.f32.mrb[0].mxu0
        %v1448 = vadd.f32 %v479, %v1447
        %v1449 = vpop.f32.mrb[0].mxu0
        %1450 = vdwg.mxu0
        %1451 = vmatprep.subr.bf16.mxu0 0
        %1452 = vmatpush1.bf16.msra.mxu0 %v1043
        %1453 = vmatprep.subr.bf16.mxu0 0
        %1454 = vmatpush1.bf16.msra.mxu0 %v1046
        %1455 = vmatprep.subr.bf16.mxu0 0
        %1456 = vmatpush1.bf16.msra.mxu0 %v1049
        %1457 = vmatprep.subr.bf16.mxu0 0
        %1458 = vmatpush1.bf16.msra.mxu0 %v1052
        %1459 = vmatprep.subr.bf16.mxu0 0
        %1460 = vmatpush1.bf16.msra.mxu0 %v1055
        %1461 = vmatprep.subr.bf16.mxu0 0
        %1462 = vmatpush1.bf16.msra.mxu0 %v1058
        %1463 = vmatprep.subr.bf16.mxu0 0
        %1464 = vmatpush1.bf16.msra.mxu0 %v1061
        %1465 = vmatprep.subr.bf16.mxu0 0
        %1466 = vmatpush1.bf16.msra.mxu0 %v1064
        %1467 = vmatprep.subr.bf16.mxu0 0
        %1468 = vmatpush1.bf16.msra.mxu0 %v1067
        %1469 = vmatprep.subr.bf16.mxu0 0
        %1470 = vmatpush1.bf16.msra.mxu0 %v1070
        %1471 = vmatprep.subr.bf16.mxu0 0
        %1472 = vmatpush1.bf16.msra.mxu0 %v1073
        %1473 = vmatprep.subr.bf16.mxu0 0
        %1474 = vmatpush1.bf16.msra.mxu0 %v1076
        %1475 = vmatprep.subr.bf16.mxu0 0
        %1476 = vmatpush1.bf16.msra.mxu0 %v1079
        %1477 = vmatprep.subr.bf16.mxu0 0
        %1478 = vmatpush1.bf16.msra.mxu0 %v1082
        %1479 = vmatprep.subr.bf16.mxu0 0
        %1480 = vmatpush1.bf16.msra.mxu0 %v1085
        %1481 = vmatprep.subr.bf16.mxu0 0
        %1482 = vmatpush1.bf16.msra.mxu0 %v1088
        %1483 = vmatprep.mubr.bf16.mxu0 %v504
        %1484 = vmatmul.mubr.bf16.gmra.mrb[0].mxu0 %v503
        %v1485 = vpop.f32.mrb[0].mxu0
        %v1486 = vadd.f32 %v1445, %v1485
        %v1487 = vpop.f32.mrb[0].mxu0
        %v1488 = vpop.f32.mrb[0].mxu0
        %v1489 = vadd.f32 %v1448, %v1488
        %v1490 = vpop.f32.mrb[0].mxu0
        %1491 = vdwg.mxu0
        %1492 = vmatprep.subr.bf16.mxu0 0
        %1493 = vmatpush1.bf16.msra.mxu0 %v1091
        %1494 = vmatprep.subr.bf16.mxu0 0
        %1495 = vmatpush1.bf16.msra.mxu0 %v1094
        %1496 = vmatprep.subr.bf16.mxu0 0
        %1497 = vmatpush1.bf16.msra.mxu0 %v1097
        %1498 = vmatprep.subr.bf16.mxu0 0
        %1499 = vmatpush1.bf16.msra.mxu0 %v1100
        %1500 = vmatprep.subr.bf16.mxu0 0
        %1501 = vmatpush1.bf16.msra.mxu0 %v1103
        %1502 = vmatprep.subr.bf16.mxu0 0
        %1503 = vmatpush1.bf16.msra.mxu0 %v1106
        %1504 = vmatprep.subr.bf16.mxu0 0
        %1505 = vmatpush1.bf16.msra.mxu0 %v1109
        %1506 = vmatprep.subr.bf16.mxu0 0
        %1507 = vmatpush1.bf16.msra.mxu0 %v1112
        %1508 = vmatprep.subr.bf16.mxu0 0
        %1509 = vmatpush1.bf16.msra.mxu0 %v1115
        %1510 = vmatprep.subr.bf16.mxu0 0
        %1511 = vmatpush1.bf16.msra.mxu0 %v1118
        %1512 = vmatprep.subr.bf16.mxu0 0
        %1513 = vmatpush1.bf16.msra.mxu0 %v1121
        %1514 = vmatprep.subr.bf16.mxu0 0
        %1515 = vmatpush1.bf16.msra.mxu0 %v1124
        %1516 = vmatprep.subr.bf16.mxu0 0
        %1517 = vmatpush1.bf16.msra.mxu0 %v1127
        %1518 = vmatprep.subr.bf16.mxu0 0
        %1519 = vmatpush1.bf16.msra.mxu0 %v1130
        %1520 = vmatprep.subr.bf16.mxu0 0
        %1521 = vmatpush1.bf16.msra.mxu0 %v1133
        %1522 = vmatprep.subr.bf16.mxu0 0
        %1523 = vmatpush1.bf16.msra.mxu0 %v1136
        %1524 = vmatprep.mubr.bf16.mxu0 %v506
        %1525 = vmatmul.mubr.bf16.gmra.mrb[0].mxu0 %v505
        %v1526 = vpop.f32.mrb[0].mxu0
        %v1527 = vadd.f32 %v1486, %v1526
        %v1528 = vpop.f32.mrb[0].mxu0
        %v1529 = vpop.f32.mrb[0].mxu0
        %v1530 = vadd.f32 %v1489, %v1529
        %v1531 = vpop.f32.mrb[0].mxu0
        %1532 = vdwg.mxu0
        %v1533 = vpack.c.bf16 %v1406, %v1402
        %v1534 = vpack.c.bf16 %v1408, %v1404
        %v1535 = vpack.c.bf16 %v1530, %v1527
        %v1539 = vunpack.c.l.b16 %v1533
        %v1540 = vunpack.c.l.b16 %v1534
        %v1541 = vunpack.c.l.b16 %v1535
        %v1542 = vunpack.c.h.b16 %v1533
        %v1543 = vunpack.c.h.b16 %v1534
        %v1544 = vunpack.c.h.b16 %v1535
        %v1545 = vpack.c.b16 %v1540, %v1539
        %v1546 = vpack.c.b16 %v1541, %v1541
        %v1547 = vpack.c.b16 %v1543, %v1542
        %v1548 = vpack.c.b16 %v1544, %v1544
        %1553 = vst [vmem:[%s261] sm:$0xff] %v1545
        %1554 = vst [vmem:[%s261 + $0x8] sm:$0xf] %v1546
        %1555 = vst [vmem:[%s261 + $0xc] sm:$0xff] %v1547
        %1556 = vst [vmem:[%s261 + $0x14] sm:$0xf] %v1548
        %s1557 = sand.u32 %s121, 1
        %s1558 = scalar_lea.sflag [#allocation4], %s1557
        %s1559 = sand.u32 %s121, 1
        %s1560 = smul.addr %s1559, 24
        %s1561 = scalar_lea.vmem [#allocation8], %s1560
        // Predicated region
        $region45: #{tpu_custom_call.1} parent=31 // pred_check
          %p1562 = pneg %p131
        $region46: #{tpu_custom_call.1} parent=31 // pred_check_branch
          %1564 = sbr.rel (%p1562) target = $region48
        $region47: #{tpu_custom_call.1} parent=31 // pred_region
          %s1565 = smul.u32 2, %s25
          %s1566 = smul.u32 3, %s26
          %s1568 = ssub.s32 384, 384
          %1569 = vsyncadd %s1558, %s1568
          %s1570 = smul.addr %s1565, 18
          %s1571 = sadd.s32 %s1566, %s1570
          %s1572 = smul.addr %s1571, 64
          %s1573 = scalar_lea.hbm %s3, %s1572
          %s1574 = sshll.u32 %s1561, 4
          %s1575 = int_to_ptr.vmem [resolvable:$true] %s1574
          %1580 = dma.vmem_to_hbm [thread:$0]  %s1575, 384, %s1573, %s1558, 192, 1152, 12
        $region48: #{tpu_custom_call.1} parent=31 // pred_fallthru
          _
      $region32: #{tpu_custom_call.1} parent=5 // pred_fallthru
        _
      %p1581 = scmp.le.s32.totalorder 2, %s16
      // Predicated region
      $region49: #{tpu_custom_call.1} parent=5 // pred_check
        %p1582 = pneg %p1581
      $region50: #{tpu_custom_call.1} parent=5 // pred_check_branch
        %1584 = sbr.rel (%p1582) target = $region52
      $region51: #{tpu_custom_call.1} parent=5 // pred_region
        %s1585 = ssub.s32 %s16, 2
        // Predicated region
        $region53: #{tpu_custom_call.1} parent=51 // pred_check
          %p1586 = pneg %p137
        $region54: #{tpu_custom_call.1} parent=51 // pred_check_branch
          %1588 = sbr.rel (%p1586) target = $region56
        $region55: #{tpu_custom_call.1} parent=51 // pred_region
          %s1589 = sand.u32 %s122, 1
          %s1590 = scalar_lea.sflag [#allocation4], %s1589
          %s1591 = sand.u32 %s122, 1
          %s1592 = smul.addr %s1591, 24
          %s1593 = scalar_lea.vmem [#allocation8], %s1592
          %1594 = dma.done %s1590, 384
        $region56: #{tpu_custom_call.1} parent=51 // pred_fallthru
          _
      $region52: #{tpu_custom_call.1} parent=5 // pred_fallthru
        _
    $region6: #{tpu_custom_call.1} parent=1 // loop_footer
      %s20 = sadd.s32 1, %s16
    $region7: #{tpu_custom_call.1} parent=1 // loop_footer_branch
      %15 = sbr.rel target = $region3
    $region8: #{tpu_custom_call.1} parent=1 // loop_exit
      _
    %1595 = vsyncpa [#allocation3], 1
    %s1596 = scalar_lea.sflag [#allocation3], 1
    %1597 = vsyncpa %s1596, 1
    %1598 = vsyncpa [#allocation6], 1
    %s1599 = scalar_lea.sflag [#allocation6], 1
    %1600 = vsyncpa %s1599, 1
    %1601 = vsyncpa [#allocation4], 1
    %s1602 = scalar_lea.sflag [#allocation4], 1
    %1603 = vsyncpa %s1602, 1

</llo_original>
